<compile_context>
chip_gen: v5e
topology: v5e:2x2
jax: 0.10.0
libtpu: 0.0.40
codegen_flags: <defaults>
</compile_context>

<pallas_src>
import functools

import jax
import jax.numpy as jnp
from jax.experimental import pallas as pl
from jax.experimental.pallas import tpu as pltpu

GATE_BIAS = 0.0
LN_EPS = 1e-5


def _gated_cat_map_kernel(*refs, odim, xdim, indim, split_k, fuse_bm,
                          bf16_act, one_pass_ln):
    it = iter(refs)
    h_ref = next(it)                      # (TB, odim)
    x_ref = next(it)                      # (TB, xdim)
    if split_k:
        wa_h_ref = next(it)               # (odim, zdim)
        wa_x_ref = next(it)               # (xdim, zdim)
    else:
        wa_ref = next(it)                 # (indim, zdim)
    ba_ref = next(it)                     # (1, zdim) f32 (beta already folded in)
    if fuse_bm:
        wbm_ref = next(it)                # (zdim, 2*odim)
        bbm_ref = next(it)                # (1, 2*odim) f32
    else:
        wb_ref = next(it)                 # (zdim, odim)
        bb_ref = next(it)                 # (1, odim) f32
        wm_ref = next(it)                 # (zdim, odim)
        bmix_ref = next(it)               # (1, odim) f32
    o_ref = next(it)                      # (TB, odim)
    cat_ref = None if split_k else next(it)   # (TB, indim) scratch, weight dtype

    h = h_ref[...].astype(jnp.float32)
    x = x_ref[...].astype(jnp.float32)

    # ---- LayerNorm stats over the virtual concat [h, x] (no f32 concat) ------
    inv_n = 1.0 / indim
    if one_pass_ln:
        # One pass: all four cross-lane reductions issue back-to-back (XLU).
        s1 = jnp.sum(h, axis=-1, keepdims=True) + jnp.sum(x, axis=-1, keepdims=True)
        s2 = (jnp.sum(h * h, axis=-1, keepdims=True)
              + jnp.sum(x * x, axis=-1, keepdims=True))
        mu = s1 * inv_n
        var = jnp.maximum(s2 * inv_n - mu * mu, 0.0)   # clamp f32 cancellation
    else:
        mu = (jnp.sum(h, axis=-1, keepdims=True)
              + jnp.sum(x, axis=-1, keepdims=True)) * inv_n
        var = (jnp.sum((h - mu) ** 2, axis=-1, keepdims=True)
               + jnp.sum((x - mu) ** 2, axis=-1, keepdims=True)) * inv_n
    rstd = jax.lax.rsqrt(var + LN_EPS)
    # LN affine (gamma, beta) is folded into wa / ba on the host.
    hn = (h - mu) * rstd
    xn = (x - mu) * rstd
    # dropout(p=0.0 / eval) == identity -> folded out.

    # ---- linA -----------------------------------------------------------------
    if split_k:
        # v5-class MXU is 128 deep: two K=odim dots are already full pushes.
        wdt = wa_h_ref.dtype
        za = jnp.dot(hn.astype(wdt), wa_h_ref[...],
                     preferred_element_type=jnp.float32)
        za = za + jnp.dot(xn.astype(wdt), wa_x_ref[...],
                          preferred_element_type=jnp.float32)
    else:
        # v6e/v7x: one K=indim dot fills the 256-deep MXU; lane-aligned concat
        # via a VMEM scratch (odim % 128 == 0).
        cat_ref[:, :odim] = hn.astype(cat_ref.dtype)
        cat_ref[:, odim:] = xn.astype(cat_ref.dtype)
        za = jnp.dot(cat_ref[...], wa_ref[...],
                     preferred_element_type=jnp.float32)
    za = za + ba_ref[...]                  # (TB, zdim), f32

    # ---- CELU(alpha=1) --------------------------------------------------------
    # (exp(min)-1 rather than expm1: precision loss near 0- is below tolerance.)
    if bf16_act:
        # Result is truncated to bf16 for the next dot anyway; halves EUP/VPU
        # vreg traffic on chips with a bf16 vector path.
        zab = za.astype(jnp.bfloat16)
        cact = jnp.where(zab > 0, zab, jnp.exp(jnp.minimum(zab, 0)) - 1)
    else:
        cact = jnp.where(za > 0.0, za, jnp.exp(jnp.minimum(za, 0.0)) - 1.0)

    # ---- linB | linMix --------------------------------------------------------
    if fuse_bm:
        bm = jnp.dot(cact.astype(wbm_ref.dtype), wbm_ref[...],
                     preferred_element_type=jnp.float32)
        bm = bm + bbm_ref[...]             # (TB, 2*odim)
        cand = bm[:, :odim]                # 128-aligned static slices
        mix_logit = bm[:, odim:]
    else:
        c = cact.astype(wb_ref.dtype)
        cand = jnp.dot(c, wb_ref[...],
                       preferred_element_type=jnp.float32) + bb_ref[...]
        mix_logit = jnp.dot(c, wm_ref[...],
                            preferred_element_type=jnp.float32) + bmix_ref[...]

    mix = jax.nn.sigmoid(mix_logit)        # f32 sigmoid (output precision)

    # ---- gated mix:  h*mix + cand*(1-mix) == cand + (h-cand)*mix --------------
    o_ref[...] = (cand + (h - cand) * mix).astype(o_ref.dtype)


def _device_kind():
    try:
        return jax.devices()[0].device_kind.lower()
    except Exception:
        return ""


def _pick_tb(B, cap, num_tc):
    """Largest divisor of B <= cap that is a multiple of 8 (or B itself).

    On multi-TensorCore chips (v7x) the cap is lowered so the grid has at least
    `num_tc` steps whenever B is large enough to split."""
    eff_cap = cap
    if num_tc > 1 and B >= num_tc * 128:
        eff_cap = min(cap, B // num_tc)
    best = None
    for t in range(min(B, eff_cap), 0, -1):
        if B % t == 0 and (t % 8 == 0 or t == B):
            best = t
            break
    return best if best is not None else B   # fallback: single full-batch block


def gated_cat_map(h, x, params, *, tb=None, out_dtype=None, one_pass_ln=True):
    """forward(h, x) of GatedCatMap with indim = h.dim + x.dim, odim = h.dim."""
    B, odim = h.shape
    Bx, xdim = x.shape
    assert Bx == B
    indim = odim + xdim
    gamma, beta, wa, ba, wb, bb, wm, bmix = params
    zdim = wa.shape[1]
    assert wa.shape == (indim, zdim)
    assert wb.shape == (zdim, odim) and wm.shape == (zdim, odim)

    # ---- device-generation heuristics ----------------------------------------
    kind = _device_kind()
    is_v5 = "v5" in kind          # 128-deep MXU, no bf16 VPU/EUP
    is_v7 = "v7" in kind          # 2 TensorCores, 64 MiB VMEM
    num_tc = 2 if is_v7 else 1

    cap = 128 if is_v5 else 256   # v5e: larger tb only adds f32 spill traffic
    if tb is None:
        tb = _pick_tb(B, cap, num_tc)
    assert B % tb == 0

    lane_ok = (odim % 128 == 0)
    split_k = is_v5 or not lane_ok     # full-K concat needs 128-aligned boundary
    fuse_bm = lane_ok                  # fused [Wb|Wm] slice needs 128-aligned odim
    bf16_act = not is_v5

    # ---- host-side parameter prep (free under jit) ----------------------------
    f32 = jnp.float32
    wdtype = wa.dtype
    # Fold LN affine into linA:  ((z*g + b) @ Wa) == z @ (g[:,None]*Wa) + b @ Wa
    wa_f32 = wa.astype(f32)
    wa_folded = (gamma.astype(f32)[:, None] * wa_f32).astype(wdtype)
    ba2 = (ba.astype(f32) + beta.astype(f32) @ wa_f32).reshape(1, zdim)

    row = lambda i: (i, 0)             # batch-tiled operands
    rep = lambda i: (0, 0)             # grid-invariant params

    single_buffer = is_v7 and hasattr(pl, "Buffered")

    def rep_spec(shape):
        # v7x only: weights/biases are fetched once -> drop the 2nd pipeline
        # buffer to fit the 64 MiB VMEM budget at production dims.
        if single_buffer:
            try:
                return pl.BlockSpec(shape, rep, pipeline_mode=pl.Buffered(1))
            except TypeError:
                pass
        return pl.BlockSpec(shape, rep)

    operands = [h, x]
    in_specs = [pl.BlockSpec((tb, odim), row), pl.BlockSpec((tb, xdim), row)]
    if split_k:
        operands += [wa_folded[:odim], wa_folded[odim:]]
        in_specs += [rep_spec((odim, zdim)), rep_spec((xdim, zdim))]
    else:
        operands += [wa_folded]
        in_specs += [rep_spec((indim, zdim))]
    operands += [ba2]
    in_specs += [rep_spec((1, zdim))]
    if fuse_bm:
        wbm = jnp.concatenate([wb, wm], axis=1)                       # (zdim, 2*odim)
        bbm = jnp.concatenate([bb, bmix], axis=0).astype(f32).reshape(1, 2 * odim)
        operands += [wbm, bbm]
        in_specs += [rep_spec((zdim, 2 * odim)), rep_spec((1, 2 * odim))]
    else:
        operands += [wb, bb.astype(f32).reshape(1, odim),
                     wm, bmix.astype(f32).reshape(1, odim)]
        in_specs += [rep_spec((zdim, odim)), rep_spec((1, odim)),
                     rep_spec((zdim, odim)), rep_spec((1, odim))]

    scratch_shapes = [] if split_k else [pltpu.VMEM((tb, indim), wdtype)]

    out_dtype = h.dtype if out_dtype is None else out_dtype

    bytes_accessed = sum(int(a.size) * a.dtype.itemsize for a in operands)
    bytes_accessed += B * odim * jnp.dtype(out_dtype).itemsize
    flops = 2 * B * (indim * zdim + zdim * 2 * odim)
    transcendentals = B * (zdim + odim + 1)   # CELU exp + sigmoid + rsqrt

    kernel = functools.partial(
        _gated_cat_map_kernel, odim=odim, xdim=xdim, indim=indim,
        split_k=split_k, fuse_bm=fuse_bm, bf16_act=bf16_act,
        one_pass_ln=one_pass_ln)

    return pl.pallas_call(
        kernel,
        out_shape=jax.ShapeDtypeStruct((B, odim), out_dtype),
        grid=(B // tb,),
        in_specs=in_specs,
        out_specs=pl.BlockSpec((tb, odim), row),
        scratch_shapes=scratch_shapes,
        compiler_params=pltpu.CompilerParams(
            dimension_semantics=("parallel",),
            vmem_limit_bytes=64 * 1024 * 1024),
        cost_estimate=pl.CostEstimate(
            flops=flops,
            transcendentals=transcendentals,
            bytes_accessed=bytes_accessed),
    )(*operands)


def gated_cat_map_reference(h, x, params):
    """Pure-JAX mirror of GatedCatMap.forward (same bf16 weight precision)."""
    gamma, beta, wa, ba, wb, bb, wm, bm = params
    cat = jnp.concatenate([h, x], axis=-1)
    mu = jnp.mean(cat, -1, keepdims=True)
    var = jnp.mean((cat - mu) ** 2, -1, keepdims=True)
    nrm = (cat - mu) * jax.lax.rsqrt(var + LN_EPS) * gamma + beta
    # dropout(p=0.0 / eval) == identity
    za = jnp.dot(nrm.astype(wa.dtype), wa,
                 preferred_element_type=jnp.float32) + ba
    cact = jnp.where(za > 0.0, za, jnp.exp(jnp.minimum(za, 0.0)) - 1.0)  # CELU
    cact_c = cact.astype(wb.dtype)
    cand = jnp.dot(cact_c, wb, preferred_element_type=jnp.float32) + bb
    mix = jax.nn.sigmoid(
        jnp.dot(cact_c, wm, preferred_element_type=jnp.float32) + bm)
    return h * mix + cand * (1 - mix)


if __name__ == "__main__":
    # Typical resrgat usage: GatedCatMap(indim=2*dim, odim=dim) on (h, x).
    B, odim, xdim = 16, 128, 128
    indim = odim + xdim
    zdim = indim                                   # default zdim = indim

    key = jax.random.PRNGKey(0)
    ks = jax.random.split(key, 9)

    h = jax.random.normal(ks[0], (B, odim), jnp.float32)
    x = jax.random.normal(ks[1], (B, xdim), jnp.float32)

    wdtype = jnp.bfloat16                          # weights fed to the MXU in bf16
    gamma = 1.0 + 0.1 * jax.random.normal(ks[2], (indim,), jnp.float32)
    beta = 0.1 * jax.random.normal(ks[3], (indim,), jnp.float32)
    # Weights stored transposed vs torch.nn.Linear: (in_features, out_features).
    wa = (jax.random.normal(ks[4], (indim, zdim), jnp.float32)
          * (1.0 / indim ** 0.5)).astype(wdtype)
    ba = 0.05 * jax.random.normal(ks[5], (zdim,), jnp.float32)
    wb = (jax.random.normal(ks[6], (zdim, odim), jnp.float32)
          * (1.0 / zdim ** 0.5)).astype(wdtype)
    bb = 0.05 * jax.random.normal(ks[7], (odim,), jnp.float32)
    wm = (jax.random.normal(ks[8], (zdim, odim), jnp.float32)
          * (1.0 / zdim ** 0.5)).astype(wdtype)
    bm = jnp.full((odim,), float(GATE_BIAS), jnp.float32)  # linMix.bias = gate_bias

    params = (gamma, beta, wa, ba, wb, bb, wm, bm)

    out = jax.block_until_ready(gated_cat_map(h, x, params))
    ref = gated_cat_map_reference(h, x, params)

    assert out.shape == (B, odim)
    # bf16-weight-class tolerance: folding gamma/beta into the bf16 linA weights
    # and the bf16 CELU re-round the operands differently from the reference,
    # giving O(1e-2) worst-case element deviations (both are ~equally accurate
    # approximations of the f32 math).
    assert jnp.allclose(out, ref, atol=2e-2, rtol=2e-2), "mismatch vs reference"

    print("KERNEL_OK")
</pallas_src>

<mosaic_0001>
module attributes {stable_mosaic.version = 11 : i64} {
  func.func @_gated_cat_map_kernel(%arg0: i32, %arg1: memref<16x128xf32, #tpu.memory_space<vmem>>, %arg2: memref<16x128xf32, #tpu.memory_space<vmem>>, %arg3: memref<256x256xbf16, #tpu.memory_space<vmem>>, %arg4: memref<1x256xf32, #tpu.memory_space<vmem>>, %arg5: memref<256x256xbf16, #tpu.memory_space<vmem>>, %arg6: memref<1x256xf32, #tpu.memory_space<vmem>>, %arg7: memref<16x128xf32, #tpu.memory_space<vmem>>, %arg8: memref<16x256xbf16, #tpu.memory_space<vmem>>) attributes {dimension_semantics = [#tpu.dimension_semantics<parallel>], iteration_bounds = array<i64: 1>, scalar_prefetch = 0 : i64, scratch_operands = 1 : i64, tpu.core_type = #tpu.core_type<tc>, window_params = [{transform_indices = @transform_0, window_bounds = array<i64: 16, 128>}, {transform_indices = @transform_1, window_bounds = array<i64: 16, 128>}, {pipeline_mode = #tpu.pipeline_mode<synchronous>, transform_indices = @transform_2, window_bounds = array<i64: 256, 256>}, {pipeline_mode = #tpu.pipeline_mode<synchronous>, transform_indices = @transform_3, window_bounds = array<i64: 1, 256>}, {pipeline_mode = #tpu.pipeline_mode<synchronous>, transform_indices = @transform_4, window_bounds = array<i64: 256, 256>}, {pipeline_mode = #tpu.pipeline_mode<synchronous>, transform_indices = @transform_5, window_bounds = array<i64: 1, 256>}, {transform_indices = @transform_6, window_bounds = array<i64: 16, 128>}]} {
    %c0 = arith.constant 0 : index
    %c0_0 = arith.constant 0 : index
    %0 = vector.load %arg1[%c0, %c0_0] : memref<16x128xf32, #tpu.memory_space<vmem>>, vector<16x128xf32>
    %c0_1 = arith.constant 0 : index
    %c0_2 = arith.constant 0 : index
    %1 = vector.load %arg2[%c0_1, %c0_2] : memref<16x128xf32, #tpu.memory_space<vmem>>, vector<16x128xf32>
    %cst = arith.constant dense<0.000000e+00> : vector<16xf32>
    %2 = vector.multi_reduction <add>, %0, %cst [1] : vector<16x128xf32> to vector<16xf32>
    %3 = vector.shape_cast %2 : vector<16xf32> to vector<16x1xf32>
    %cst_3 = arith.constant dense<0.000000e+00> : vector<16xf32>
    %4 = vector.multi_reduction <add>, %1, %cst_3 [1] : vector<16x128xf32> to vector<16xf32>
    %5 = vector.shape_cast %4 : vector<16xf32> to vector<16x1xf32>
    %6 = arith.addf %3, %5 : vector<16x1xf32>
    %7 = arith.mulf %0, %0 : vector<16x128xf32>
    %cst_4 = arith.constant dense<0.000000e+00> : vector<16xf32>
    %8 = vector.multi_reduction <add>, %7, %cst_4 [1] : vector<16x128xf32> to vector<16xf32>
    %9 = vector.shape_cast %8 : vector<16xf32> to vector<16x1xf32>
    %10 = arith.mulf %1, %1 : vector<16x128xf32>
    %cst_5 = arith.constant dense<0.000000e+00> : vector<16xf32>
    %11 = vector.multi_reduction <add>, %10, %cst_5 [1] : vector<16x128xf32> to vector<16xf32>
    %12 = vector.shape_cast %11 : vector<16xf32> to vector<16x1xf32>
    %13 = arith.addf %9, %12 : vector<16x1xf32>
    %cst_6 = arith.constant 3.906250e-03 : f32
    %14 = vector.broadcast %cst_6 : f32 to vector<16x1xf32>
    %15 = arith.mulf %6, %14 : vector<16x1xf32>
    %cst_7 = arith.constant 3.906250e-03 : f32
    %16 = vector.broadcast %cst_7 : f32 to vector<16x1xf32>
    %17 = arith.mulf %13, %16 : vector<16x1xf32>
    %18 = arith.mulf %15, %15 : vector<16x1xf32>
    %19 = arith.subf %17, %18 : vector<16x1xf32>
    %cst_8 = arith.constant 0.000000e+00 : f32
    %20 = vector.broadcast %cst_8 : f32 to vector<16x1xf32>
    %21 = arith.maximumf %19, %20 : vector<16x1xf32>
    %cst_9 = arith.constant 9.99999974E-6 : f32
    %22 = vector.broadcast %cst_9 : f32 to vector<16x1xf32>
    %23 = arith.addf %21, %22 : vector<16x1xf32>
    %24 = math.rsqrt %23 : vector<16x1xf32>
    %25 = vector.broadcast %15 : vector<16x1xf32> to vector<16x128xf32>
    %26 = arith.subf %0, %25 : vector<16x128xf32>
    %27 = vector.broadcast %24 : vector<16x1xf32> to vector<16x128xf32>
    %28 = arith.mulf %26, %27 : vector<16x128xf32>
    %29 = vector.broadcast %15 : vector<16x1xf32> to vector<16x128xf32>
    %30 = arith.subf %1, %29 : vector<16x128xf32>
    %31 = vector.broadcast %24 : vector<16x1xf32> to vector<16x128xf32>
    %32 = arith.mulf %30, %31 : vector<16x128xf32>
    %33 = arith.truncf %28 : vector<16x128xf32> to vector<16x128xbf16>
    %c0_10 = arith.constant 0 : index
    %c0_11 = arith.constant 0 : index
    %34 = vector.load %arg8[%c0_10, %c0_11] : memref<16x256xbf16, #tpu.memory_space<vmem>>, vector<16x128xbf16>
    tpu.vector_store %arg8[%c0_10, %c0_11], %33 {strides = array<i32>} : memref<16x256xbf16, #tpu.memory_space<vmem>>, vector<16x128xbf16>,
    %35 = arith.truncf %32 : vector<16x128xf32> to vector<16x128xbf16>
    %c0_12 = arith.constant 0 : index
    %c128 = arith.constant 128 : index
    %36 = vector.load %arg8[%c0_12, %c128] : memref<16x256xbf16, #tpu.memory_space<vmem>>, vector<16x128xbf16>
    tpu.vector_store %arg8[%c0_12, %c128], %35 {strides = array<i32>} : memref<16x256xbf16, #tpu.memory_space<vmem>>, vector<16x128xbf16>,
    %c0_13 = arith.constant 0 : index
    %c0_14 = arith.constant 0 : index
    %37 = vector.load %arg8[%c0_13, %c0_14] : memref<16x256xbf16, #tpu.memory_space<vmem>>, vector<16x256xbf16>
    %c0_15 = arith.constant 0 : index
    %c0_16 = arith.constant 0 : index
    %38 = vector.load %arg3[%c0_15, %c0_16] : memref<256x256xbf16, #tpu.memory_space<vmem>>, vector<256x256xbf16>
    %cst_17 = arith.constant dense<0.000000e+00> : vector<16x256xf32>
    %39 = tpu.matmul %37, %38, %cst_17 {dimension_numbers = #tpu.dot_dimension_numbers<[1], [0], [0], [1], [0, 0, 1, 1], [], []>} : vector<16x256xbf16>, vector<256x256xbf16>, vector<16x256xf32> -> vector<16x256xf32>
    %c0_18 = arith.constant 0 : index
    %c0_19 = arith.constant 0 : index
    %40 = vector.load %arg4[%c0_18, %c0_19] : memref<1x256xf32, #tpu.memory_space<vmem>>, vector<1x256xf32>
    %41 = vector.broadcast %40 : vector<1x256xf32> to vector<16x256xf32>
    %42 = arith.addf %39, %41 : vector<16x256xf32>
    %43 = arith.truncf %42 : vector<16x256xf32> to vector<16x256xbf16>
    %cst_20 = arith.constant 0.000000e+00 : bf16
    %44 = vector.broadcast %cst_20 : bf16 to vector<16x256xbf16>
    %45 = arith.cmpf ogt, %43, %44 : vector<16x256xbf16>
    %cst_21 = arith.constant 0.000000e+00 : bf16
    %46 = vector.broadcast %cst_21 : bf16 to vector<16x256xbf16>
    %47 = arith.minimumf %43, %46 : vector<16x256xbf16>
    %48 = math.exp %47 : vector<16x256xbf16>
    %cst_22 = arith.constant 1.000000e+00 : bf16
    %49 = vector.broadcast %cst_22 : bf16 to vector<16x256xbf16>
    %50 = arith.subf %48, %49 : vector<16x256xbf16>
    %51 = arith.select %45, %43, %50 : vector<16x256xi1>, vector<16x256xbf16>
    %c0_23 = arith.constant 0 : index
    %c0_24 = arith.constant 0 : index
    %52 = vector.load %arg5[%c0_23, %c0_24] : memref<256x256xbf16, #tpu.memory_space<vmem>>, vector<256x256xbf16>
    %cst_25 = arith.constant dense<0.000000e+00> : vector<16x256xf32>
    %53 = tpu.matmul %51, %52, %cst_25 {dimension_numbers = #tpu.dot_dimension_numbers<[1], [0], [0], [1], [0, 0, 1, 1], [], []>} : vector<16x256xbf16>, vector<256x256xbf16>, vector<16x256xf32> -> vector<16x256xf32>
    %c0_26 = arith.constant 0 : index
    %c0_27 = arith.constant 0 : index
    %54 = vector.load %arg6[%c0_26, %c0_27] : memref<1x256xf32, #tpu.memory_space<vmem>>, vector<1x256xf32>
    %55 = vector.broadcast %54 : vector<1x256xf32> to vector<16x256xf32>
    %56 = arith.addf %53, %55 : vector<16x256xf32>
    %57 = vector.extract_strided_slice %56 {offsets = [0, 0], sizes = [16, 128], strides = [1, 1]} : vector<16x256xf32> to vector<16x128xf32>
    %58 = vector.extract_strided_slice %56 {offsets = [0, 128], sizes = [16, 128], strides = [1, 1]} : vector<16x256xf32> to vector<16x128xf32>
    %59 = arith.negf %58 : vector<16x128xf32>
    %60 = math.exp %59 : vector<16x128xf32>
    %cst_28 = arith.constant 1.000000e+00 : f32
    %61 = vector.broadcast %cst_28 : f32 to vector<16x128xf32>
    %62 = arith.addf %61, %60 : vector<16x128xf32>
    %63 = arith.divf %61, %62 : vector<16x128xf32>
    %64 = arith.subf %0, %57 : vector<16x128xf32>
    %65 = arith.mulf %64, %63 : vector<16x128xf32>
    %66 = arith.addf %57, %65 : vector<16x128xf32>
    %c0_29 = arith.constant 0 : index
    %c0_30 = arith.constant 0 : index
    %67 = vector.load %arg7[%c0_29, %c0_30] : memref<16x128xf32, #tpu.memory_space<vmem>>, vector<16x128xf32>
    tpu.vector_store %arg7[%c0_29, %c0_30], %66 {strides = array<i32>} : memref<16x128xf32, #tpu.memory_space<vmem>>, vector<16x128xf32>,
    return
  }
  func.func @transform_0(%arg0: i32) -> (i32, i32) {
    %c0_i32 = arith.constant 0 : i32
    %c0_i32_0 = arith.constant 0 : i32
    return %arg0, %c0_i32 : i32, i32
  }
  func.func @transform_1(%arg0: i32) -> (i32, i32) {
    %c0_i32 = arith.constant 0 : i32
    %c0_i32_0 = arith.constant 0 : i32
    return %arg0, %c0_i32 : i32, i32
  }
  func.func @transform_2(%arg0: i32) -> (i32, i32) {
    %c0_i32 = arith.constant 0 : i32
    %c0_i32_0 = arith.constant 0 : i32
    %c0_i32_1 = arith.constant 0 : i32
    return %c0_i32, %c0_i32_0 : i32, i32
  }
  func.func @transform_3(%arg0: i32) -> (i32, i32) {
    %c0_i32 = arith.constant 0 : i32
    %c0_i32_0 = arith.constant 0 : i32
    %c0_i32_1 = arith.constant 0 : i32
    return %c0_i32, %c0_i32_0 : i32, i32
  }
  func.func @transform_4(%arg0: i32) -> (i32, i32) {
    %c0_i32 = arith.constant 0 : i32
    %c0_i32_0 = arith.constant 0 : i32
    %c0_i32_1 = arith.constant 0 : i32
    return %c0_i32, %c0_i32_0 : i32, i32
  }
  func.func @transform_5(%arg0: i32) -> (i32, i32) {
    %c0_i32 = arith.constant 0 : i32
    %c0_i32_0 = arith.constant 0 : i32
    %c0_i32_1 = arith.constant 0 : i32
    return %c0_i32, %c0_i32_0 : i32, i32
  }
  func.func @transform_6(%arg0: i32) -> (i32, i32) {
    %c0_i32 = arith.constant 0 : i32
    %c0_i32_0 = arith.constant 0 : i32
    return %arg0, %c0_i32 : i32, i32
  }
}

</mosaic_0001>

<llo_original>
// kernel: tpu_custom_call.1
$region0: #{tpu_custom_call.1}
  #allocation0 [shape = 'u32[]', space=smem, size = 0x4, offset = 0x4, fixed_abs, tag = 'smem constant byte address 0x4 - core index']
  #allocation1 [shape = 'u32[72,128]{1,0:T(1,128)}', space=vmem, size = 0x9000, scoped, tag = 'internal scratch']
  #allocation2 [shape = 'bf16[16,256]{1,0:T(8,128)(2,1)}', space=vmem, size = 0x2000, scoped, tag = 'scratch operand']
  %s0 = inlined_call_operand.hbm [shape: f32[16,128], index: 0, kind: input, shape index: {}]
  %s1 = inlined_call_operand.hbm [shape: f32[16,128], index: 1, kind: input, shape index: {}]
  %s2 = inlined_call_operand.hbm [shape: bf16[256,256], index: 2, kind: input, shape index: {}]
  %s3 = inlined_call_operand.vmem [shape: f32[1,256], index: 3, kind: input, shape index: {}]
  %s4 = inlined_call_operand.hbm [shape: bf16[256,256], index: 4, kind: input, shape index: {}]
  %s5 = inlined_call_operand.vmem [shape: f32[1,256], index: 5, kind: input, shape index: {}]
  %s6 = inlined_call_operand.hbm [shape: f32[16,128], index: 6, kind: output, shape index: {}]
  %s7 = sld [smem:[#allocation0]]
  $region50: #{tpu_custom_call.1} parent=0
    _
  %s9 = ssub.s32 1, %s7
  %s10 = scalar_select 0, %s9, %s7
  $region1: #{tpu_custom_call.1} parent=0
    #allocation3 [shape = 'u8[8192]{0}', space=vmem, size = 0x2000, scoped, tag = 'input window, operand 0, single buffered']
    #allocation4 [shape = 's32[1]{0}', space=sflag, size = 0x4, scoped, tag = 'scoped memory for tpu_custom_call.1']
    #allocation5 [shape = 's32[1]{0}', space=sflag, size = 0x4, scoped, tag = 'scoped memory for tpu_custom_call.1']
    #allocation6 [shape = 'u8[8192]{0}', space=vmem, size = 0x2000, scoped, tag = 'input window, operand 1, single buffered']
    #allocation7 [shape = 's32[1]{0}', space=sflag, size = 0x4, scoped, tag = 'scoped memory for tpu_custom_call.1']
    #allocation8 [shape = 'u8[131072]{0}', space=vmem, size = 0x20000, scoped, tag = 'input window, operand 2, single buffered']
    #allocation9 [shape = 'u8[131072]{0}', space=vmem, size = 0x20000, scoped, tag = 'input window, operand 4, single buffered']
    #allocation10 [shape = 's32[1]{0}', space=sflag, size = 0x4, scoped, tag = 'scoped memory for tpu_custom_call.1']
    #allocation11 [shape = 'u8[8192]{0}', space=vmem, size = 0x2000, scoped, tag = 'output window, operand 0, single buffered']
    %11 = vsyncpa [#allocation4], 0
    %12 = vsyncpa [#allocation7], 0
    %13 = vsyncpa [#allocation10], 0
    %14 = vsyncpa [#allocation5], 0
    // Predicated region
    $region2: #{tpu_custom_call.1} parent=1 // pred_check
      _
    $region3: #{tpu_custom_call.1} parent=1 // pred_check_branch
      %16 = sbr.rel (0) target = $region5
    $region4: #{tpu_custom_call.1} parent=1 // pred_region
      %18 = vsyncadd [#allocation4], 0
      %s19 = sshll.u32 %s0, 4
      %s20 = int_to_ptr.hbm [resolvable:$true] %s19
      %s21 = sshll.u32 [#allocation3], 4
      %s22 = int_to_ptr.vmem [resolvable:$true] %s21
      %27 = dma.hbm_to_vmem [thread:$0]  %s20, 256, %s22, [#allocation4], 128, 128, 8
    $region5: #{tpu_custom_call.1} parent=1 // pred_fallthru
      _
    // Predicated region
    $region6: #{tpu_custom_call.1} parent=1 // pred_check
      _
    $region7: #{tpu_custom_call.1} parent=1 // pred_check_branch
      %29 = sbr.rel (0) target = $region9
    $region8: #{tpu_custom_call.1} parent=1 // pred_region
      %31 = vsyncadd [#allocation7], 0
      %s32 = sshll.u32 %s1, 4
      %s33 = int_to_ptr.hbm [resolvable:$true] %s32
      %s34 = sshll.u32 [#allocation6], 4
      %s35 = int_to_ptr.vmem [resolvable:$true] %s34
      %40 = dma.hbm_to_vmem [thread:$0]  %s33, 256, %s35, [#allocation7], 128, 128, 8
    $region9: #{tpu_custom_call.1} parent=1 // pred_fallthru
      _
    // Predicated region
    $region10: #{tpu_custom_call.1} parent=1 // pred_check
      _
    $region11: #{tpu_custom_call.1} parent=1 // pred_check_branch
      %42 = sbr.rel (0) target = $region13
    $region12: #{tpu_custom_call.1} parent=1 // pred_region
      %44 = vsyncadd [#allocation7], 0
      %s45 = sshll.u32 %s2, 4
      %s46 = int_to_ptr.hbm [resolvable:$true] %s45
      %s47 = sshll.u32 [#allocation8], 4
      %s48 = int_to_ptr.vmem [resolvable:$true] %s47
      %53 = dma.hbm_to_vmem [thread:$0]  %s46, 4096, %s48, [#allocation7], 128, 128, 8
    $region13: #{tpu_custom_call.1} parent=1 // pred_fallthru
      _
    // Predicated region
    $region14: #{tpu_custom_call.1} parent=1 // pred_check
      _
    $region15: #{tpu_custom_call.1} parent=1 // pred_check_branch
      %55 = sbr.rel (0) target = $region17
    $region16: #{tpu_custom_call.1} parent=1 // pred_region
      _
    $region17: #{tpu_custom_call.1} parent=1 // pred_fallthru
      _
    // Predicated region
    $region18: #{tpu_custom_call.1} parent=1 // pred_check
      _
    $region19: #{tpu_custom_call.1} parent=1 // pred_check_branch
      %57 = sbr.rel (0) target = $region21
    $region20: #{tpu_custom_call.1} parent=1 // pred_region
      %59 = vsyncadd [#allocation10], 0
      %s60 = sshll.u32 %s4, 4
      %s61 = int_to_ptr.hbm [resolvable:$true] %s60
      %s62 = sshll.u32 [#allocation9], 4
      %s63 = int_to_ptr.vmem [resolvable:$true] %s62
      %68 = dma.hbm_to_vmem [thread:$0]  %s61, 4096, %s63, [#allocation10], 128, 128, 8
    $region21: #{tpu_custom_call.1} parent=1 // pred_fallthru
      _
    // Predicated region
    $region22: #{tpu_custom_call.1} parent=1 // pred_check
      _
    $region23: #{tpu_custom_call.1} parent=1 // pred_check_branch
      %70 = sbr.rel (0) target = $region25
    $region24: #{tpu_custom_call.1} parent=1 // pred_region
      _
    $region25: #{tpu_custom_call.1} parent=1 // pred_fallthru
      _
    // Predicated region
    $region26: #{tpu_custom_call.1} parent=1 // pred_check
      _
    $region27: #{tpu_custom_call.1} parent=1 // pred_check_branch
      %72 = sbr.rel (0) target = $region29
    $region28: #{tpu_custom_call.1} parent=1 // pred_region
      %74 = dma.done [#allocation4], 256
    $region29: #{tpu_custom_call.1} parent=1 // pred_fallthru
      _
    // Predicated region
    $region30: #{tpu_custom_call.1} parent=1 // pred_check
      _
    $region31: #{tpu_custom_call.1} parent=1 // pred_check_branch
      %76 = sbr.rel (0) target = $region33
    $region32: #{tpu_custom_call.1} parent=1 // pred_region
      %78 = dma.done [#allocation7], 256
    $region33: #{tpu_custom_call.1} parent=1 // pred_fallthru
      _
    // Predicated region
    $region34: #{tpu_custom_call.1} parent=1 // pred_check
      _
    $region35: #{tpu_custom_call.1} parent=1 // pred_check_branch
      %80 = sbr.rel (0) target = $region37
    $region36: #{tpu_custom_call.1} parent=1 // pred_region
      %82 = dma.done [#allocation7], 4096
    $region37: #{tpu_custom_call.1} parent=1 // pred_fallthru
      _
    // Predicated region
    $region38: #{tpu_custom_call.1} parent=1 // pred_check
      _
    $region39: #{tpu_custom_call.1} parent=1 // pred_check_branch
      %84 = sbr.rel (0) target = $region41
    $region40: #{tpu_custom_call.1} parent=1 // pred_region
      %86 = dma.done [#allocation10], 4096
    $region41: #{tpu_custom_call.1} parent=1 // pred_fallthru
      _
    %v87 = vld [vmem:[#allocation3] sm:$0xff]
    %v88 = vld [vmem:[#allocation3 + $0x8] sm:$0xff]
    %v89 = vld [vmem:[#allocation6] sm:$0xff]
    %v90 = vld [vmem:[#allocation6 + $0x8] sm:$0xff]
    %91 = vadd.xlane.f32.xlu0 %v87
    %v92 = vpop.xlane.xlu0 %91
    %93 = vadd.xlane.f32.xlu0 %v88
    %v94 = vpop.xlane.xlu0 %93
    %95 = vadd.xlane.f32.xlu0 %v89
    %v96 = vpop.xlane.xlu0 %95
    %97 = vadd.xlane.f32.xlu0 %v90
    %v98 = vpop.xlane.xlu0 %97
    %v99 = vadd.f32 %v92, %v96
    %v100 = vadd.f32 %v94, %v98
    %v101 = vmul.f32 %v87, %v87
    %v102 = vmul.f32 %v88, %v88
    %103 = vadd.xlane.f32.xlu0 %v101
    %v104 = vpop.xlane.xlu0 %103
    %105 = vadd.xlane.f32.xlu0 %v102
    %v106 = vpop.xlane.xlu0 %105
    %v107 = vmul.f32 %v89, %v89
    %v108 = vmul.f32 %v90, %v90
    %109 = vadd.xlane.f32.xlu0 %v107
    %v110 = vpop.xlane.xlu0 %109
    %111 = vadd.xlane.f32.xlu0 %v108
    %v112 = vpop.xlane.xlu0 %111
    %v113 = vadd.f32 %v104, %v110
    %v114 = vadd.f32 %v106, %v112
    %v115 = vmul.f32 %v99, 0.00390625
    %v116 = vmul.f32 %v100, 0.00390625
    %v117 = vmul.f32 %v113, 0.00390625
    %v118 = vmul.f32 %v114, 0.00390625
    %v119 = vmul.f32 %v115, %v115
    %v120 = vmul.f32 %v116, %v116
    %v121 = vsub.f32 %v117, %v119
    %v122 = vsub.f32 %v118, %v120
    %v123 = vmax.f32 %v121, 0.0
    %v124 = vmax.f32 %v122, 0.0
    %v125 = vadd.f32 %v123, 1e-05
    %v126 = vadd.f32 %v124, 1e-05
    %v127 = vrsqrt.pop %v125
    %v128 = vmul.f32 %v127, %v125
    %v129 = vmul.f32 %v128, %v127
    %v130 = vmul.f32 0.5, %v129
    %v131 = vsub.f32 1.5, %v130
    %v132 = vmul.f32 %v127, %v131
    %vm133 = vweird.f32 %v125
    %vm134 = vweird.f32 %v127
    %vm135 = vmor %vm133, %vm134
    %v136 = vsel %vm135, %v127, %v132
    %v137 = vrsqrt.pop %v126
    %v138 = vmul.f32 %v137, %v126
    %v139 = vmul.f32 %v138, %v137
    %v140 = vmul.f32 0.5, %v139
    %v141 = vsub.f32 1.5, %v140
    %v142 = vmul.f32 %v137, %v141
    %vm143 = vweird.f32 %v126
    %vm144 = vweird.f32 %v137
    %vm145 = vmor %vm143, %vm144
    %v146 = vsel %vm145, %v137, %v142
    %v147 = vsub.f32 %v87, %v115
    %v148 = vsub.f32 %v88, %v116
    %v149 = vmul.f32 %v147, %v136
    %v150 = vmul.f32 %v148, %v146
    %v151 = vsub.f32 %v89, %v115
    %v152 = vsub.f32 %v90, %v116
    %v153 = vmul.f32 %v151, %v136
    %v154 = vmul.f32 %v152, %v146
    %v155 = vpack.c.bf16 %v149, %v149
    %v156 = vpack.c.bf16 %v150, %v150
    %157 = vst [vmem:[#allocation2] sm:$0xf] %v155
    %158 = vst [vmem:[#allocation2 + $0x8] sm:$0xf] %v156
    %v159 = vpack.c.bf16 %v153, %v153
    %v160 = vpack.c.bf16 %v154, %v154
    %161 = vst [vmem:[#allocation2 + $0x4] sm:$0xf] %v159
    %162 = vst [vmem:[#allocation2 + $0xc] sm:$0xf] %v160
    %v163 = vld [vmem:[#allocation2] sm:$0xff]
    %v164 = vld [vmem:[#allocation2 + $0x8] sm:$0xff]
    %v165 = vld [vmem:[#allocation8] sm:$0xff]
    %v166 = vld [vmem:[#allocation8 + $0x8] sm:$0xff]
    %v167 = vld [vmem:[#allocation8 + $0x10] sm:$0xff]
    %v168 = vld [vmem:[#allocation8 + $0x18] sm:$0xff]
    %v169 = vld [vmem:[#allocation8 + $0x20] sm:$0xff]
    %v170 = vld [vmem:[#allocation8 + $0x28] sm:$0xff]
    %v171 = vld [vmem:[#allocation8 + $0x30] sm:$0xff]
    %v172 = vld [vmem:[#allocation8 + $0x38] sm:$0xff]
    %v173 = vld [vmem:[#allocation8 + $0x40] sm:$0xff]
    %v174 = vld [vmem:[#allocation8 + $0x48] sm:$0xff]
    %v175 = vld [vmem:[#allocation8 + $0x50] sm:$0xff]
    %v176 = vld [vmem:[#allocation8 + $0x58] sm:$0xff]
    %v177 = vld [vmem:[#allocation8 + $0x60] sm:$0xff]
    %v178 = vld [vmem:[#allocation8 + $0x68] sm:$0xff]
    %v179 = vld [vmem:[#allocation8 + $0x70] sm:$0xff]
    %v180 = vld [vmem:[#allocation8 + $0x78] sm:$0xff]
    %v181 = vld [vmem:[#allocation8 + $0x80] sm:$0xff]
    %v182 = vld [vmem:[#allocation8 + $0x88] sm:$0xff]
    %v183 = vld [vmem:[#allocation8 + $0x90] sm:$0xff]
    %v184 = vld [vmem:[#allocation8 + $0x98] sm:$0xff]
    %v185 = vld [vmem:[#allocation8 + $0xa0] sm:$0xff]
    %v186 = vld [vmem:[#allocation8 + $0xa8] sm:$0xff]
    %v187 = vld [vmem:[#allocation8 + $0xb0] sm:$0xff]
    %v188 = vld [vmem:[#allocation8 + $0xb8] sm:$0xff]
    %v189 = vld [vmem:[#allocation8 + $0xc0] sm:$0xff]
    %v190 = vld [vmem:[#allocation8 + $0xc8] sm:$0xff]
    %v191 = vld [vmem:[#allocation8 + $0xd0] sm:$0xff]
    %v192 = vld [vmem:[#allocation8 + $0xd8] sm:$0xff]
    %v193 = vld [vmem:[#allocation8 + $0xe0] sm:$0xff]
    %v194 = vld [vmem:[#allocation8 + $0xe8] sm:$0xff]
    %v195 = vld [vmem:[#allocation8 + $0xf0] sm:$0xff]
    %v196 = vld [vmem:[#allocation8 + $0xf8] sm:$0xff]
    %v197 = vld [vmem:[%s3] sm:$0x3]
    %v199 = vperm.slane %v197, 0
    %v200 = vperm.slane %v197, 1
    %v205 = vunpack.c.l.b16 %v163
    %v206 = vunpack.c.h.b16 %v163
    %v207 = vunpack.c.l.b16 %v164
    %v208 = vunpack.c.h.b16 %v164
    %v209 = vpack.c.b16 %v207, %v205
    %v210 = vpack.c.b16 %v208, %v206
    %v245 = vunpack.c.l.b16 %v165
    %v246 = vunpack.c.h.b16 %v165
    %v247 = vunpack.c.l.b16 %v166
    %v248 = vunpack.c.h.b16 %v166
    %v249 = vunpack.c.l.b16 %v167
    %v250 = vunpack.c.h.b16 %v167
    %v251 = vunpack.c.l.b16 %v168
    %v252 = vunpack.c.h.b16 %v168
    %v253 = vunpack.c.l.b16 %v169
    %v254 = vunpack.c.h.b16 %v169
    %v255 = vunpack.c.l.b16 %v170
    %v256 = vunpack.c.h.b16 %v170
    %v257 = vunpack.c.l.b16 %v171
    %v258 = vunpack.c.h.b16 %v171
    %v259 = vunpack.c.l.b16 %v172
    %v260 = vunpack.c.h.b16 %v172
    %v261 = vunpack.c.l.b16 %v173
    %v262 = vunpack.c.h.b16 %v173
    %v263 = vunpack.c.l.b16 %v174
    %v264 = vunpack.c.h.b16 %v174
    %v265 = vunpack.c.l.b16 %v175
    %v266 = vunpack.c.h.b16 %v175
    %v267 = vunpack.c.l.b16 %v176
    %v268 = vunpack.c.h.b16 %v176
    %v269 = vunpack.c.l.b16 %v177
    %v270 = vunpack.c.h.b16 %v177
    %v271 = vunpack.c.l.b16 %v178
    %v272 = vunpack.c.h.b16 %v178
    %v273 = vunpack.c.l.b16 %v179
    %v274 = vunpack.c.h.b16 %v179
    %v275 = vunpack.c.l.b16 %v180
    %v276 = vunpack.c.h.b16 %v180
    %v277 = vunpack.c.l.b16 %v181
    %v278 = vunpack.c.h.b16 %v181
    %v279 = vunpack.c.l.b16 %v182
    %v280 = vunpack.c.h.b16 %v182
    %v281 = vunpack.c.l.b16 %v183
    %v282 = vunpack.c.h.b16 %v183
    %v283 = vunpack.c.l.b16 %v184
    %v284 = vunpack.c.h.b16 %v184
    %v285 = vunpack.c.l.b16 %v185
    %v286 = vunpack.c.h.b16 %v185
    %v287 = vunpack.c.l.b16 %v186
    %v288 = vunpack.c.h.b16 %v186
    %v289 = vunpack.c.l.b16 %v187
    %v290 = vunpack.c.h.b16 %v187
    %v291 = vunpack.c.l.b16 %v188
    %v292 = vunpack.c.h.b16 %v188
    %v293 = vunpack.c.l.b16 %v189
    %v294 = vunpack.c.h.b16 %v189
    %v295 = vunpack.c.l.b16 %v190
    %v296 = vunpack.c.h.b16 %v190
    %v297 = vunpack.c.l.b16 %v191
    %v298 = vunpack.c.h.b16 %v191
    %v299 = vunpack.c.l.b16 %v192
    %v300 = vunpack.c.h.b16 %v192
    %v301 = vunpack.c.l.b16 %v193
    %v302 = vunpack.c.h.b16 %v193
    %v303 = vunpack.c.l.b16 %v194
    %v304 = vunpack.c.h.b16 %v194
    %v305 = vunpack.c.l.b16 %v195
    %v306 = vunpack.c.h.b16 %v195
    %v307 = vunpack.c.l.b16 %v196
    %v308 = vunpack.c.h.b16 %v196
    %v309 = vpack.c.b16 %v247, %v245
    %v310 = vpack.c.b16 %v248, %v246
    %v311 = vpack.c.b16 %v251, %v249
    %v312 = vpack.c.b16 %v252, %v250
    %v313 = vpack.c.b16 %v255, %v253
    %v314 = vpack.c.b16 %v256, %v254
    %v315 = vpack.c.b16 %v259, %v257
    %v316 = vpack.c.b16 %v260, %v258
    %v317 = vpack.c.b16 %v263, %v261
    %v318 = vpack.c.b16 %v264, %v262
    %v319 = vpack.c.b16 %v267, %v265
    %v320 = vpack.c.b16 %v268, %v266
    %v321 = vpack.c.b16 %v271, %v269
    %v322 = vpack.c.b16 %v272, %v270
    %v323 = vpack.c.b16 %v275, %v273
    %v324 = vpack.c.b16 %v276, %v274
    %v325 = vpack.c.b16 %v279, %v277
    %v326 = vpack.c.b16 %v280, %v278
    %v327 = vpack.c.b16 %v283, %v281
    %v328 = vpack.c.b16 %v284, %v282
    %v329 = vpack.c.b16 %v287, %v285
    %v330 = vpack.c.b16 %v288, %v286
    %v331 = vpack.c.b16 %v291, %v289
    %v332 = vpack.c.b16 %v292, %v290
    %v333 = vpack.c.b16 %v295, %v293
    %v334 = vpack.c.b16 %v296, %v294
    %v335 = vpack.c.b16 %v299, %v297
    %v336 = vpack.c.b16 %v300, %v298
    %v337 = vpack.c.b16 %v303, %v301
    %v338 = vpack.c.b16 %v304, %v302
    %v339 = vpack.c.b16 %v307, %v305
    %v340 = vpack.c.b16 %v308, %v306
    %373 = vmatpush.bf16.msra.mxu0 %v323
    %374 = vmatpush.bf16.msra.mxu0 %v321
    %375 = vmatpush.bf16.msra.mxu0 %v319
    %376 = vmatpush.bf16.msra.mxu0 %v317
    %377 = vmatpush.bf16.msra.mxu0 %v315
    %378 = vmatpush.bf16.msra.mxu0 %v313
    %379 = vmatpush.bf16.msra.mxu0 %v311
    %380 = vmatpush.bf16.msra.mxu0 %v309
    %381 = vmatmul.bf16.gmra.mxu0 %v209
    %v382 = vpop.f32.mrf.mxu0
    %v383 = vadd.f32 %v199, %v382
    %v384 = vpop.f32.mrf.mxu0
    %v385 = vadd.f32 %v199, %v384
    %386 = vdwg.mxu0
    %387 = vmatpush.bf16.msra.mxu0 %v339
    %388 = vmatpush.bf16.msra.mxu0 %v337
    %389 = vmatpush.bf16.msra.mxu0 %v335
    %390 = vmatpush.bf16.msra.mxu0 %v333
    %391 = vmatpush.bf16.msra.mxu0 %v331
    %392 = vmatpush.bf16.msra.mxu0 %v329
    %393 = vmatpush.bf16.msra.mxu0 %v327
    %394 = vmatpush.bf16.msra.mxu0 %v325
    %395 = vmatmul.bf16.gmra.mxu0 %v210
    %v396 = vpop.f32.mrf.mxu0
    %v397 = vadd.f32 %v383, %v396
    %v398 = vpop.f32.mrf.mxu0
    %v399 = vadd.f32 %v385, %v398
    %400 = vdwg.mxu0
    %401 = vmatpush.bf16.msra.mxu0 %v324
    %402 = vmatpush.bf16.msra.mxu0 %v322
    %403 = vmatpush.bf16.msra.mxu0 %v320
    %404 = vmatpush.bf16.msra.mxu0 %v318
    %405 = vmatpush.bf16.msra.mxu0 %v316
    %406 = vmatpush.bf16.msra.mxu0 %v314
    %407 = vmatpush.bf16.msra.mxu0 %v312
    %408 = vmatpush.bf16.msra.mxu0 %v310
    %409 = vmatmul.bf16.gmra.mxu0 %v209
    %v410 = vpop.f32.mrf.mxu0
    %v411 = vadd.f32 %v200, %v410
    %v412 = vpop.f32.mrf.mxu0
    %v413 = vadd.f32 %v200, %v412
    %414 = vdwg.mxu0
    %415 = vmatpush.bf16.msra.mxu0 %v340
    %416 = vmatpush.bf16.msra.mxu0 %v338
    %417 = vmatpush.bf16.msra.mxu0 %v336
    %418 = vmatpush.bf16.msra.mxu0 %v334
    %419 = vmatpush.bf16.msra.mxu0 %v332
    %420 = vmatpush.bf16.msra.mxu0 %v330
    %421 = vmatpush.bf16.msra.mxu0 %v328
    %422 = vmatpush.bf16.msra.mxu0 %v326
    %423 = vmatmul.bf16.gmra.mxu0 %v210
    %v424 = vpop.f32.mrf.mxu0
    %v425 = vadd.f32 %v411, %v424
    %v426 = vpop.f32.mrf.mxu0
    %v427 = vadd.f32 %v413, %v426
    %428 = vdwg.mxu0
    %v429 = vpack.c.bf16 %v425, %v397
    %v430 = vpack.c.bf16 %v427, %v399
    %v431 = vunpack.c.l.bf16 %v429
    %v432 = vunpack.c.h.bf16 %v429
    %v433 = vunpack.c.l.bf16 %v430
    %v434 = vunpack.c.h.bf16 %v430
    %vm435 = vcmp.gt.f32.partialorder %v431, 0.0
    %vm436 = vcmp.gt.f32.partialorder %v432, 0.0
    %vm437 = vcmp.gt.f32.partialorder %v433, 0.0
    %vm438 = vcmp.gt.f32.partialorder %v434, 0.0
    %v439 = vmin.f32 %v431, 0.0
    %v440 = vmin.f32 %v432, 0.0
    %v441 = vmin.f32 %v433, 0.0
    %v442 = vmin.f32 %v434, 0.0
    %v443 = vpack.c.bf16 %v440, %v439
    %v444 = vpack.c.bf16 %v442, %v441
    %v445 = vunpack.c.l.bf16 %v443
    %v446 = vunpack.c.h.bf16 %v443
    %v447 = vunpack.c.l.bf16 %v444
    %v448 = vunpack.c.h.bf16 %v444
    %v449 = vmul.f32 %v445, 1.442695
    %v450 = vpow.pop %v449
    %v451 = vmul.f32 %v446, 1.442695
    %v452 = vpow.pop %v451
    %v453 = vmul.f32 %v447, 1.442695
    %v454 = vpow.pop %v453
    %v455 = vmul.f32 %v448, 1.442695
    %v456 = vpow.pop %v455
    %v457 = vpack.c.bf16 %v452, %v450
    %v458 = vpack.c.bf16 %v456, %v454
    %v459 = vunpack.c.l.bf16 %v457
    %v460 = vunpack.c.h.bf16 %v457
    %v461 = vunpack.c.l.bf16 %v458
    %v462 = vunpack.c.h.bf16 %v458
    %v463 = vsub.f32 %v459, 1.0
    %v464 = vsub.f32 %v460, 1.0
    %v465 = vsub.f32 %v461, 1.0
    %v466 = vsub.f32 %v462, 1.0
    %v467 = vpack.c.bf16 %v464, %v463
    %v468 = vpack.c.bf16 %v466, %v465
    %vm469 = vmpackc.low %vm436, %vm435
    %vm470 = vmpackc.low %vm438, %vm437
    %v471 = vsel %vm469, %v429, %v467
    %v472 = vsel %vm470, %v430, %v468
    %v473 = vld [vmem:[#allocation9] sm:$0xff]
    %v474 = vld [vmem:[#allocation9 + $0x8] sm:$0xff]
    %v475 = vld [vmem:[#allocation9 + $0x10] sm:$0xff]
    %v476 = vld [vmem:[#allocation9 + $0x18] sm:$0xff]
    %v477 = vld [vmem:[#allocation9 + $0x20] sm:$0xff]
    %v478 = vld [vmem:[#allocation9 + $0x28] sm:$0xff]
    %v479 = vld [vmem:[#allocation9 + $0x30] sm:$0xff]
    %v480 = vld [vmem:[#allocation9 + $0x38] sm:$0xff]
    %v481 = vld [vmem:[#allocation9 + $0x40] sm:$0xff]
    %v482 = vld [vmem:[#allocation9 + $0x48] sm:$0xff]
    %v483 = vld [vmem:[#allocation9 + $0x50] sm:$0xff]
    %v484 = vld [vmem:[#allocation9 + $0x58] sm:$0xff]
    %v485 = vld [vmem:[#allocation9 + $0x60] sm:$0xff]
    %v486 = vld [vmem:[#allocation9 + $0x68] sm:$0xff]
    %v487 = vld [vmem:[#allocation9 + $0x70] sm:$0xff]
    %v488 = vld [vmem:[#allocation9 + $0x78] sm:$0xff]
    %v489 = vld [vmem:[#allocation9 + $0x80] sm:$0xff]
    %v490 = vld [vmem:[#allocation9 + $0x88] sm:$0xff]
    %v491 = vld [vmem:[#allocation9 + $0x90] sm:$0xff]
    %v492 = vld [vmem:[#allocation9 + $0x98] sm:$0xff]
    %v493 = vld [vmem:[#allocation9 + $0xa0] sm:$0xff]
    %v494 = vld [vmem:[#allocation9 + $0xa8] sm:$0xff]
    %v495 = vld [vmem:[#allocation9 + $0xb0] sm:$0xff]
    %v496 = vld [vmem:[#allocation9 + $0xb8] sm:$0xff]
    %v497 = vld [vmem:[#allocation9 + $0xc0] sm:$0xff]
    %v498 = vld [vmem:[#allocation9 + $0xc8] sm:$0xff]
    %v499 = vld [vmem:[#allocation9 + $0xd0] sm:$0xff]
    %v500 = vld [vmem:[#allocation9 + $0xd8] sm:$0xff]
    %v501 = vld [vmem:[#allocation9 + $0xe0] sm:$0xff]
    %v502 = vld [vmem:[#allocation9 + $0xe8] sm:$0xff]
    %v503 = vld [vmem:[#allocation9 + $0xf0] sm:$0xff]
    %v504 = vld [vmem:[#allocation9 + $0xf8] sm:$0xff]
    %v505 = vld [vmem:[%s5] sm:$0x3]
    %v507 = vperm.slane %v505, 0
    %v508 = vperm.slane %v505, 1
    %v513 = vunpack.c.l.b16 %v471
    %v514 = vunpack.c.h.b16 %v471
    %v515 = vunpack.c.l.b16 %v472
    %v516 = vunpack.c.h.b16 %v472
    %v517 = vpack.c.b16 %v515, %v513
    %v518 = vpack.c.b16 %v516, %v514
    %v553 = vunpack.c.l.b16 %v473
    %v554 = vunpack.c.h.b16 %v473
    %v555 = vunpack.c.l.b16 %v474
    %v556 = vunpack.c.h.b16 %v474
    %v557 = vunpack.c.l.b16 %v475
    %v558 = vunpack.c.h.b16 %v475
    %v559 = vunpack.c.l.b16 %v476
    %v560 = vunpack.c.h.b16 %v476
    %v561 = vunpack.c.l.b16 %v477
    %v562 = vunpack.c.h.b16 %v477
    %v563 = vunpack.c.l.b16 %v478
    %v564 = vunpack.c.h.b16 %v478
    %v565 = vunpack.c.l.b16 %v479
    %v566 = vunpack.c.h.b16 %v479
    %v567 = vunpack.c.l.b16 %v480
    %v568 = vunpack.c.h.b16 %v480
    %v569 = vunpack.c.l.b16 %v481
    %v570 = vunpack.c.h.b16 %v481
    %v571 = vunpack.c.l.b16 %v482
    %v572 = vunpack.c.h.b16 %v482
    %v573 = vunpack.c.l.b16 %v483
    %v574 = vunpack.c.h.b16 %v483
    %v575 = vunpack.c.l.b16 %v484
    %v576 = vunpack.c.h.b16 %v484
    %v577 = vunpack.c.l.b16 %v485
    %v578 = vunpack.c.h.b16 %v485
    %v579 = vunpack.c.l.b16 %v486
    %v580 = vunpack.c.h.b16 %v486
    %v581 = vunpack.c.l.b16 %v487
    %v582 = vunpack.c.h.b16 %v487
    %v583 = vunpack.c.l.b16 %v488
    %v584 = vunpack.c.h.b16 %v488
    %v585 = vunpack.c.l.b16 %v489
    %v586 = vunpack.c.h.b16 %v489
    %v587 = vunpack.c.l.b16 %v490
    %v588 = vunpack.c.h.b16 %v490
    %v589 = vunpack.c.l.b16 %v491
    %v590 = vunpack.c.h.b16 %v491
    %v591 = vunpack.c.l.b16 %v492
    %v592 = vunpack.c.h.b16 %v492
    %v593 = vunpack.c.l.b16 %v493
    %v594 = vunpack.c.h.b16 %v493
    %v595 = vunpack.c.l.b16 %v494
    %v596 = vunpack.c.h.b16 %v494
    %v597 = vunpack.c.l.b16 %v495
    %v598 = vunpack.c.h.b16 %v495
    %v599 = vunpack.c.l.b16 %v496
    %v600 = vunpack.c.h.b16 %v496
    %v601 = vunpack.c.l.b16 %v497
    %v602 = vunpack.c.h.b16 %v497
    %v603 = vunpack.c.l.b16 %v498
    %v604 = vunpack.c.h.b16 %v498
    %v605 = vunpack.c.l.b16 %v499
    %v606 = vunpack.c.h.b16 %v499
    %v607 = vunpack.c.l.b16 %v500
    %v608 = vunpack.c.h.b16 %v500
    %v609 = vunpack.c.l.b16 %v501
    %v610 = vunpack.c.h.b16 %v501
    %v611 = vunpack.c.l.b16 %v502
    %v612 = vunpack.c.h.b16 %v502
    %v613 = vunpack.c.l.b16 %v503
    %v614 = vunpack.c.h.b16 %v503
    %v615 = vunpack.c.l.b16 %v504
    %v616 = vunpack.c.h.b16 %v504
    %v617 = vpack.c.b16 %v555, %v553
    %v618 = vpack.c.b16 %v556, %v554
    %v619 = vpack.c.b16 %v559, %v557
    %v620 = vpack.c.b16 %v560, %v558
    %v621 = vpack.c.b16 %v563, %v561
    %v622 = vpack.c.b16 %v564, %v562
    %v623 = vpack.c.b16 %v567, %v565
    %v624 = vpack.c.b16 %v568, %v566
    %v625 = vpack.c.b16 %v571, %v569
    %v626 = vpack.c.b16 %v572, %v570
    %v627 = vpack.c.b16 %v575, %v573
    %v628 = vpack.c.b16 %v576, %v574
    %v629 = vpack.c.b16 %v579, %v577
    %v630 = vpack.c.b16 %v580, %v578
    %v631 = vpack.c.b16 %v583, %v581
    %v632 = vpack.c.b16 %v584, %v582
    %v633 = vpack.c.b16 %v587, %v585
    %v634 = vpack.c.b16 %v588, %v586
    %v635 = vpack.c.b16 %v591, %v589
    %v636 = vpack.c.b16 %v592, %v590
    %v637 = vpack.c.b16 %v595, %v593
    %v638 = vpack.c.b16 %v596, %v594
    %v639 = vpack.c.b16 %v599, %v597
    %v640 = vpack.c.b16 %v600, %v598
    %v641 = vpack.c.b16 %v603, %v601
    %v642 = vpack.c.b16 %v604, %v602
    %v643 = vpack.c.b16 %v607, %v605
    %v644 = vpack.c.b16 %v608, %v606
    %v645 = vpack.c.b16 %v611, %v609
    %v646 = vpack.c.b16 %v612, %v610
    %v647 = vpack.c.b16 %v615, %v613
    %v648 = vpack.c.b16 %v616, %v614
    %681 = vmatpush.bf16.msra.mxu0 %v631
    %682 = vmatpush.bf16.msra.mxu0 %v629
    %683 = vmatpush.bf16.msra.mxu0 %v627
    %684 = vmatpush.bf16.msra.mxu0 %v625
    %685 = vmatpush.bf16.msra.mxu0 %v623
    %686 = vmatpush.bf16.msra.mxu0 %v621
    %687 = vmatpush.bf16.msra.mxu0 %v619
    %688 = vmatpush.bf16.msra.mxu0 %v617
    %689 = vmatmul.bf16.gmra.mxu0 %v517
    %v690 = vpop.f32.mrf.mxu0
    %v691 = vadd.f32 %v507, %v690
    %v692 = vpop.f32.mrf.mxu0
    %v693 = vadd.f32 %v507, %v692
    %694 = vdwg.mxu0
    %695 = vmatpush.bf16.msra.mxu0 %v647
    %696 = vmatpush.bf16.msra.mxu0 %v645
    %697 = vmatpush.bf16.msra.mxu0 %v643
    %698 = vmatpush.bf16.msra.mxu0 %v641
    %699 = vmatpush.bf16.msra.mxu0 %v639
    %700 = vmatpush.bf16.msra.mxu0 %v637
    %701 = vmatpush.bf16.msra.mxu0 %v635
    %702 = vmatpush.bf16.msra.mxu0 %v633
    %703 = vmatmul.bf16.gmra.mxu0 %v518
    %v704 = vpop.f32.mrf.mxu0
    %v705 = vadd.f32 %v691, %v704
    %v706 = vpop.f32.mrf.mxu0
    %v707 = vadd.f32 %v693, %v706
    %708 = vdwg.mxu0
    %709 = vmatpush.bf16.msra.mxu0 %v632
    %710 = vmatpush.bf16.msra.mxu0 %v630
    %711 = vmatpush.bf16.msra.mxu0 %v628
    %712 = vmatpush.bf16.msra.mxu0 %v626
    %713 = vmatpush.bf16.msra.mxu0 %v624
    %714 = vmatpush.bf16.msra.mxu0 %v622
    %715 = vmatpush.bf16.msra.mxu0 %v620
    %716 = vmatpush.bf16.msra.mxu0 %v618
    %717 = vmatmul.bf16.gmra.mxu0 %v517
    %v718 = vpop.f32.mrf.mxu0
    %v719 = vadd.f32 %v508, %v718
    %v720 = vpop.f32.mrf.mxu0
    %v721 = vadd.f32 %v508, %v720
    %722 = vdwg.mxu0
    %723 = vmatpush.bf16.msra.mxu0 %v648
    %724 = vmatpush.bf16.msra.mxu0 %v646
    %725 = vmatpush.bf16.msra.mxu0 %v644
    %726 = vmatpush.bf16.msra.mxu0 %v642
    %727 = vmatpush.bf16.msra.mxu0 %v640
    %728 = vmatpush.bf16.msra.mxu0 %v638
    %729 = vmatpush.bf16.msra.mxu0 %v636
    %730 = vmatpush.bf16.msra.mxu0 %v634
    %731 = vmatmul.bf16.gmra.mxu0 %v518
    %v732 = vpop.f32.mrf.mxu0
    %v733 = vadd.f32 %v719, %v732
    %v734 = vpop.f32.mrf.mxu0
    %v735 = vadd.f32 %v721, %v734
    %736 = vdwg.mxu0
    %v737 = vxor.u32 %v733, 2147483648
    %v738 = vxor.u32 %v735, 2147483648
    %v739 = vmul.f32 %v737, 1.442695
    %v740 = vpow.pop %v739
    %v741 = vmul.f32 %v738, 1.442695
    %v742 = vpow.pop %v741
    %v743 = vadd.f32 %v740, 1.0
    %v744 = vadd.f32 %v742, 1.0
    %v745 = vrcp.pop %v743
    %v746 = vmul.f32 %v743, %v745
    %v747 = vsub.f32 1.0, %v746
    %v748 = vmul.f32 %v745, %v747
    %v749 = vadd.f32 %v745, %v748
    %vm750 = vweird.f32 %v743
    %vm751 = vweird.f32 %v745
    %vm752 = vmor %vm750, %vm751
    %v753 = vsel %vm752, %v745, %v749
    %v754 = vand.u32 2147483647, %v743
    %vm755 = vcmp.eq.f32.partialorder %v754, 8.507059e+37
    %v756 = vand.u32 %v743, 2147483648
    %v757 = vor.u32 1.1754944e-38, %v756
    %v758 = vsel %vm755, %v757, %v753
    %v759 = vmul.f32 1.0, %v758
    %v760 = vrcp.pop %v744
    %v761 = vmul.f32 %v744, %v760
    %v762 = vsub.f32 1.0, %v761
    %v763 = vmul.f32 %v760, %v762
    %v764 = vadd.f32 %v760, %v763
    %vm765 = vweird.f32 %v744
    %vm766 = vweird.f32 %v760
    %vm767 = vmor %vm765, %vm766
    %v768 = vsel %vm767, %v760, %v764
    %v769 = vand.u32 2147483647, %v744
    %vm770 = vcmp.eq.f32.partialorder %v769, 8.507059e+37
    %v771 = vand.u32 %v744, 2147483648
    %v772 = vor.u32 1.1754944e-38, %v771
    %v773 = vsel %vm770, %v772, %v768
    %v774 = vmul.f32 1.0, %v773
    %v775 = vsub.f32 %v87, %v705
    %v776 = vsub.f32 %v88, %v707
    %v777 = vmul.f32 %v775, %v759
    %v778 = vmul.f32 %v776, %v774
    %v779 = vadd.f32 %v705, %v777
    %v780 = vadd.f32 %v707, %v778
    %781 = vst [vmem:[#allocation11] sm:$0xff] %v779
    %782 = vst [vmem:[#allocation11 + $0x8] sm:$0xff] %v780
    // Predicated region
    $region42: #{tpu_custom_call.1} parent=1 // pred_check
      _
    $region43: #{tpu_custom_call.1} parent=1 // pred_check_branch
      %784 = sbr.rel (0) target = $region45
    $region44: #{tpu_custom_call.1} parent=1 // pred_region
      %786 = vsyncadd [#allocation5], 0
      %s787 = sshll.u32 [#allocation11], 4
      %s788 = int_to_ptr.vmem [resolvable:$true] %s787
      %s789 = sshll.u32 %s6, 4
      %s790 = int_to_ptr.hbm [resolvable:$true] %s789
      %795 = dma.vmem_to_hbm [thread:$0]  %s788, 256, %s790, [#allocation5], 128, 128, 8
    $region45: #{tpu_custom_call.1} parent=1 // pred_fallthru
      _
    // Predicated region
    $region46: #{tpu_custom_call.1} parent=1 // pred_check
      _
    $region47: #{tpu_custom_call.1} parent=1 // pred_check_branch
      %797 = sbr.rel (0) target = $region49
    $region48: #{tpu_custom_call.1} parent=1 // pred_region
      %799 = dma.done [#allocation5], 256
    $region49: #{tpu_custom_call.1} parent=1 // pred_fallthru
      _
    %800 = vsyncpa [#allocation4], 1
    %801 = vsyncpa [#allocation7], 1
    %802 = vsyncpa [#allocation10], 1
    %803 = vsyncpa [#allocation5], 1

</llo_original>
